<compile_context>
chip_gen: v7x
topology: tpu7x:2x2x1
jax: 0.10.0
libtpu: 0.0.40
codegen_flags: <defaults>
</compile_context>

<pallas_src>
import jax
import jax.numpy as jnp
from jax.experimental import pallas as pl
from jax.experimental.pallas import tpu as pltpu

RESIDUAL_WEIGHT = 0.001
_OUT_LANES = 128  # pad the width-1 output layer to a full lane width (unmasked stores)


# ----------------------------------------------------------------------------
# Kernel
# ----------------------------------------------------------------------------
def _sage_net_kernel(a_ref, x_ref,
                     w1a_ref, w1c_ref, b1_ref,
                     w2a_ref, w2c_ref, b2_ref,
                     out_ref):
    A = a_ref[...]            # [N, N] dense adjacency (dst, src), resident across the grid
    X = x_ref[...]            # [N, Din] current sample

    # ---- layer 1 (folded residual): relu( (A@X)@W1_agg + X@W1_comb + b1_comb ) ----
    agg1 = jnp.dot(A, X, preferred_element_type=jnp.float32)
    h1 = (jnp.dot(agg1, w1a_ref[...], preferred_element_type=jnp.float32)
          + jnp.dot(X, w1c_ref[...], preferred_element_type=jnp.float32)
          + b1_ref[...])
    h1 = jnp.maximum(h1, 0.0)

    # ---- layer 2 (folded residual, output lane-padded to 128) ----
    agg2 = jnp.dot(A, h1, preferred_element_type=jnp.float32)
    h2 = (jnp.dot(agg2, w2a_ref[...], preferred_element_type=jnp.float32)
          + jnp.dot(h1, w2c_ref[...], preferred_element_type=jnp.float32)
          + b2_ref[...])

    out_ref[...] = jnp.clip(h2, -10.0, 10.0)   # (N, 128); only column 0 is real


# ----------------------------------------------------------------------------
# Host-side helpers
# ----------------------------------------------------------------------------
def fold_params(params):
    """Fold the rw/(1-rw) residual blend into the weights/biases (done once on host)."""
    rw = RESIDUAL_WEIGHT
    w1a = rw * params["w1_l"]
    w1c = rw * params["w1_r"] + (1.0 - rw) * params["w1_res"]
    b1 = rw * params["b1_l"] + (1.0 - rw) * params["b1_res"]
    w2a = rw * params["w2_l"]
    w2c = rw * params["w2_r"] + (1.0 - rw) * params["w2_res"]
    b2 = rw * params["b2_l"] + (1.0 - rw) * params["b2_res"]

    def pad_lanes(m):  # pad output-dim 1 -> 128 with zero columns (lane-dense stores)
        return jnp.pad(m, ((0, 0), (0, _OUT_LANES - m.shape[1])))

    return {
        "w1a": w1a.astype(jnp.float32), "w1c": w1c.astype(jnp.float32),
        "b1": b1.astype(jnp.float32),
        "w2a": pad_lanes(w2a).astype(jnp.float32),
        "w2c": pad_lanes(w2c).astype(jnp.float32),
        "b2": pad_lanes(b2).astype(jnp.float32),
    }


def edge_index_to_dense_adj(edge_index, num_nodes):
    """A[dst, src] = multiplicity of edge src->dst (message flow src -> dst)."""
    src = edge_index[0]
    dst = edge_index[1]
    A = jnp.zeros((num_nodes, num_nodes), jnp.float32)
    A = A.at[dst, src].add(1.0)
    return A
    # TODO(synk): at production graph sizes replace dense A@x with a scalar-prefetch
    # CSR segment-sum and tile A over destination-node blocks (v7x VMEM is 64 MiB).


def _run_batched(A, xb, fp):
    """xb: [B, N, Din] float32. Returns logits [B, N]."""
    B, N, Din = xb.shape
    H = fp["w1a"].shape[1]

    def const(shape):  # whole array, resident across the batch grid
        return pl.BlockSpec(shape, lambda b, _s=shape: (0,) * len(_s))

    out = pl.pallas_call(
        _sage_net_kernel,
        out_shape=jax.ShapeDtypeStruct((B, N, _OUT_LANES), jnp.float32),
        grid=(B,),
        in_specs=[
            const((N, N)),                                       # A
            pl.BlockSpec((None, N, Din), lambda b: (b, 0, 0)),   # x (per-sample block)
            const((Din, H)), const((Din, H)), const((1, H)),     # layer 1 folded params
            const((H, _OUT_LANES)), const((H, _OUT_LANES)),      # layer 2 folded params
            const((1, _OUT_LANES)),
        ],
        out_specs=pl.BlockSpec((None, N, _OUT_LANES), lambda b: (b, 0, 0)),
        compiler_params=pltpu.CompilerParams(
            dimension_semantics=("parallel",)),                  # shards batch on v7x 2 TCs
    )(A, xb, fp["w1a"], fp["w1c"], fp["b1"], fp["w2a"], fp["w2c"], fp["b2"])
    return out[:, :, 0]   # drop the lane padding -> [B, N]


def graphsage_bernoulli_forward(x, edge_index, params):
    """Mirrors GraphSAGENet_BernoulliNet_residual.forward. Returns (logits,)."""
    fp = fold_params(params)
    if x.ndim == 3:
        num_nodes = x.shape[1]
        A = edge_index_to_dense_adj(edge_index, num_nodes)
        logits = _run_batched(A, x, fp)                  # [B, N]
    else:
        num_nodes = x.shape[0]
        A = edge_index_to_dense_adj(edge_index, num_nodes)
        logits = _run_batched(A, x[None], fp)[0]         # [N]
    return (logits,)


def init_params(key, input_dim, hidden_dim):
    """Deterministic synthetic parameters (weights stored as [in, out])."""
    ks = jax.random.split(key, 12)

    def w(k, shape, scale=0.1):
        return (scale * jax.random.normal(k, shape)).astype(jnp.float32)

    return {
        # layer 1: SAGEConv(input_dim, hidden_dim) + residual Linear
        "w1_l":   w(ks[0], (input_dim, hidden_dim)),
        "b1_l":   w(ks[1], (1, hidden_dim)),
        "w1_r":   w(ks[2], (input_dim, hidden_dim)),
        "w1_res": w(ks[3], (input_dim, hidden_dim)),
        "b1_res": w(ks[4], (1, hidden_dim)),
        # layer 2: SAGEConv(hidden_dim, 1) + residual Linear
        "w2_l":   w(ks[5], (hidden_dim, 1)),
        "b2_l":   w(ks[6], (1, 1)),
        "w2_r":   w(ks[7], (hidden_dim, 1)),
        "w2_res": w(ks[8], (hidden_dim, 1)),
        "b2_res": w(ks[9], (1, 1)),
    }


def _reference_forward(x, edge_index, params):
    """Pure-JAX reference with the original (unfolded) order of operations."""
    rw = RESIDUAL_WEIGHT

    def layer(A, X, wl, bl, wr, wres, bres):
        h_sage = (A @ X) @ wl + bl + X @ wr
        h_res = X @ wres + bres
        return rw * h_sage + (1.0 - rw) * h_res

    def single(x2d):
        A = edge_index_to_dense_adj(edge_index, x2d.shape[0])
        h1 = jnp.maximum(layer(A, x2d, params["w1_l"], params["b1_l"], params["w1_r"],
                               params["w1_res"], params["b1_res"]), 0.0)
        h2 = layer(A, h1, params["w2_l"], params["b2_l"], params["w2_r"],
                   params["w2_res"], params["b2_res"])
        return jnp.clip(h2[:, 0], -10.0, 10.0)

    if x.ndim == 3:
        return jnp.stack([single(x[i]) for i in range(x.shape[0])], axis=0)
    return single(x)


if __name__ == "__main__":
    key = jax.random.PRNGKey(0)
    k_x, k_e, k_p = jax.random.split(key, 3)

    num_samples, num_nodes, input_dim, hidden_dim, num_edges = 2, 16, 8, 32, 40

    # 3D node features [num_samples, N, input_dim]  (exercises the x.dim()==3 branch)
    x = jax.random.normal(k_x, (num_samples, num_nodes, input_dim), dtype=jnp.float32)
    # edge_index [2, E] with row 0 = source nodes, row 1 = target nodes
    edge_index = jax.random.randint(k_e, (2, num_edges), 0, num_nodes, dtype=jnp.int32)

    params = init_params(k_p, input_dim, hidden_dim)

    # batched (3D) branch
    (logits,) = graphsage_bernoulli_forward(x, edge_index, params)
    logits = jax.block_until_ready(logits)
    ref = jax.block_until_ready(_reference_forward(x, edge_index, params))
    assert logits.shape == (num_samples, num_nodes), logits.shape
    assert jnp.allclose(logits, ref, atol=1e-4, rtol=1e-4)

    # single-graph (2D) branch
    (logits2,) = graphsage_bernoulli_forward(x[0], edge_index, params)
    logits2 = jax.block_until_ready(logits2)
    ref2 = jax.block_until_ready(_reference_forward(x[0], edge_index, params))
    assert logits2.shape == (num_nodes,), logits2.shape
    assert jnp.allclose(logits2, ref2, atol=1e-4, rtol=1e-4)

    print("KERNEL_OK")
</pallas_src>

<mosaic_0001>
module attributes {stable_mosaic.version = 11 : i64} {
  func.func @_sage_net_kernel(%arg0: i32, %arg1: memref<16x16xf32, #tpu.memory_space<vmem>>, %arg2: memref<1x16x8xf32, #tpu.memory_space<vmem>>, %arg3: memref<8x32xf32, #tpu.memory_space<vmem>>, %arg4: memref<8x32xf32, #tpu.memory_space<vmem>>, %arg5: memref<1x32xf32, #tpu.memory_space<vmem>>, %arg6: memref<32x128xf32, #tpu.memory_space<vmem>>, %arg7: memref<32x128xf32, #tpu.memory_space<vmem>>, %arg8: memref<1x128xf32, #tpu.memory_space<vmem>>, %arg9: memref<1x16x128xf32, #tpu.memory_space<vmem>>) attributes {dimension_semantics = [#tpu.dimension_semantics<parallel>], iteration_bounds = array<i64: 2>, scalar_prefetch = 0 : i64, scratch_operands = 0 : i64, tpu.core_type = #tpu.core_type<tc>, window_params = [{pipeline_mode = #tpu.pipeline_mode<synchronous>, transform_indices = @transform_0, window_bounds = array<i64: 16, 16>}, {transform_indices = @transform_1, window_bounds = array<i64: 1, 16, 8>}, {pipeline_mode = #tpu.pipeline_mode<synchronous>, transform_indices = @transform_2, window_bounds = array<i64: 8, 32>}, {pipeline_mode = #tpu.pipeline_mode<synchronous>, transform_indices = @transform_3, window_bounds = array<i64: 8, 32>}, {pipeline_mode = #tpu.pipeline_mode<synchronous>, transform_indices = @transform_4, window_bounds = array<i64: 1, 32>}, {pipeline_mode = #tpu.pipeline_mode<synchronous>, transform_indices = @transform_5, window_bounds = array<i64: 32, 128>}, {pipeline_mode = #tpu.pipeline_mode<synchronous>, transform_indices = @transform_6, window_bounds = array<i64: 32, 128>}, {pipeline_mode = #tpu.pipeline_mode<synchronous>, transform_indices = @transform_7, window_bounds = array<i64: 1, 128>}, {transform_indices = @transform_8, window_bounds = array<i64: 1, 16, 128>}]} {
    %c0 = arith.constant 0 : index
    %c0_0 = arith.constant 0 : index
    %0 = vector.load %arg1[%c0, %c0_0] : memref<16x16xf32, #tpu.memory_space<vmem>>, vector<16x16xf32>
    %c0_1 = arith.constant 0 : index
    %c0_2 = arith.constant 0 : index
    %c0_3 = arith.constant 0 : index
    %1 = vector.load %arg2[%c0_1, %c0_2, %c0_3] : memref<1x16x8xf32, #tpu.memory_space<vmem>>, vector<1x16x8xf32>
    %2 = vector.shape_cast %1 : vector<1x16x8xf32> to vector<16x8xf32>
    %cst = arith.constant dense<0.000000e+00> : vector<16x8xf32>
    %3 = tpu.matmul %0, %2, %cst {dimension_numbers = #tpu.dot_dimension_numbers<[1], [0], [0], [1], [0, 0, 1, 1], [], []>} : vector<16x16xf32>, vector<16x8xf32>, vector<16x8xf32> -> vector<16x8xf32>
    %c0_4 = arith.constant 0 : index
    %c0_5 = arith.constant 0 : index
    %4 = vector.load %arg3[%c0_4, %c0_5] : memref<8x32xf32, #tpu.memory_space<vmem>>, vector<8x32xf32>
    %cst_6 = arith.constant dense<0.000000e+00> : vector<16x32xf32>
    %5 = tpu.matmul %3, %4, %cst_6 {dimension_numbers = #tpu.dot_dimension_numbers<[1], [0], [0], [1], [0, 0, 1, 1], [], []>} : vector<16x8xf32>, vector<8x32xf32>, vector<16x32xf32> -> vector<16x32xf32>
    %c0_7 = arith.constant 0 : index
    %c0_8 = arith.constant 0 : index
    %6 = vector.load %arg4[%c0_7, %c0_8] : memref<8x32xf32, #tpu.memory_space<vmem>>, vector<8x32xf32>
    %cst_9 = arith.constant dense<0.000000e+00> : vector<16x32xf32>
    %7 = tpu.matmul %2, %6, %cst_9 {dimension_numbers = #tpu.dot_dimension_numbers<[1], [0], [0], [1], [0, 0, 1, 1], [], []>} : vector<16x8xf32>, vector<8x32xf32>, vector<16x32xf32> -> vector<16x32xf32>
    %8 = arith.addf %5, %7 : vector<16x32xf32>
    %c0_10 = arith.constant 0 : index
    %c0_11 = arith.constant 0 : index
    %9 = vector.load %arg5[%c0_10, %c0_11] : memref<1x32xf32, #tpu.memory_space<vmem>>, vector<1x32xf32>
    %10 = vector.broadcast %9 : vector<1x32xf32> to vector<16x32xf32>
    %11 = arith.addf %8, %10 : vector<16x32xf32>
    %cst_12 = arith.constant 0.000000e+00 : f32
    %12 = vector.broadcast %cst_12 : f32 to vector<16x32xf32>
    %13 = arith.maximumf %11, %12 : vector<16x32xf32>
    %cst_13 = arith.constant dense<0.000000e+00> : vector<16x32xf32>
    %14 = tpu.matmul %0, %13, %cst_13 {dimension_numbers = #tpu.dot_dimension_numbers<[1], [0], [0], [1], [0, 0, 1, 1], [], []>} : vector<16x16xf32>, vector<16x32xf32>, vector<16x32xf32> -> vector<16x32xf32>
    %c0_14 = arith.constant 0 : index
    %c0_15 = arith.constant 0 : index
    %15 = vector.load %arg6[%c0_14, %c0_15] : memref<32x128xf32, #tpu.memory_space<vmem>>, vector<32x128xf32>
    %cst_16 = arith.constant dense<0.000000e+00> : vector<16x128xf32>
    %16 = tpu.matmul %14, %15, %cst_16 {dimension_numbers = #tpu.dot_dimension_numbers<[1], [0], [0], [1], [0, 0, 1, 1], [], []>} : vector<16x32xf32>, vector<32x128xf32>, vector<16x128xf32> -> vector<16x128xf32>
    %c0_17 = arith.constant 0 : index
    %c0_18 = arith.constant 0 : index
    %17 = vector.load %arg7[%c0_17, %c0_18] : memref<32x128xf32, #tpu.memory_space<vmem>>, vector<32x128xf32>
    %cst_19 = arith.constant dense<0.000000e+00> : vector<16x128xf32>
    %18 = tpu.matmul %13, %17, %cst_19 {dimension_numbers = #tpu.dot_dimension_numbers<[1], [0], [0], [1], [0, 0, 1, 1], [], []>} : vector<16x32xf32>, vector<32x128xf32>, vector<16x128xf32> -> vector<16x128xf32>
    %19 = arith.addf %16, %18 : vector<16x128xf32>
    %c0_20 = arith.constant 0 : index
    %c0_21 = arith.constant 0 : index
    %20 = vector.load %arg8[%c0_20, %c0_21] : memref<1x128xf32, #tpu.memory_space<vmem>>, vector<1x128xf32>
    %21 = vector.broadcast %20 : vector<1x128xf32> to vector<16x128xf32>
    %22 = arith.addf %19, %21 : vector<16x128xf32>
    %cst_22 = arith.constant -1.000000e+01 : f32
    %cst_23 = arith.constant 1.000000e+01 : f32
    %23 = vector.broadcast %cst_22 : f32 to vector<16x128xf32>
    %24 = arith.maximumf %23, %22 : vector<16x128xf32>
    %25 = vector.broadcast %cst_23 : f32 to vector<16x128xf32>
    %26 = arith.minimumf %25, %24 : vector<16x128xf32>
    %c0_24 = arith.constant 0 : index
    %c0_25 = arith.constant 0 : index
    %c0_26 = arith.constant 0 : index
    %27 = vector.load %arg9[%c0_24, %c0_25, %c0_26] : memref<1x16x128xf32, #tpu.memory_space<vmem>>, vector<1x16x128xf32>
    %28 = vector.shape_cast %27 : vector<1x16x128xf32> to vector<16x128xf32>
    %29 = vector.shape_cast %26 : vector<16x128xf32> to vector<1x16x128xf32>
    tpu.vector_store %arg9[%c0_24, %c0_25, %c0_26], %29 {strides = array<i32>} : memref<1x16x128xf32, #tpu.memory_space<vmem>>, vector<1x16x128xf32>,
    return
  }
  func.func @transform_0(%arg0: i32) -> (i32, i32) {
    %c0_i32 = arith.constant 0 : i32
    %c0_i32_0 = arith.constant 0 : i32
    %c0_i32_1 = arith.constant 0 : i32
    return %c0_i32, %c0_i32_0 : i32, i32
  }
  func.func @transform_1(%arg0: i32) -> (i32, i32, i32) {
    %c0_i32 = arith.constant 0 : i32
    %c0_i32_0 = arith.constant 0 : i32
    %c0_i32_1 = arith.constant 0 : i32
    return %arg0, %c0_i32, %c0_i32_0 : i32, i32, i32
  }
  func.func @transform_2(%arg0: i32) -> (i32, i32) {
    %c0_i32 = arith.constant 0 : i32
    %c0_i32_0 = arith.constant 0 : i32
    %c0_i32_1 = arith.constant 0 : i32
    return %c0_i32, %c0_i32_0 : i32, i32
  }
  func.func @transform_3(%arg0: i32) -> (i32, i32) {
    %c0_i32 = arith.constant 0 : i32
    %c0_i32_0 = arith.constant 0 : i32
    %c0_i32_1 = arith.constant 0 : i32
    return %c0_i32, %c0_i32_0 : i32, i32
  }
  func.func @transform_4(%arg0: i32) -> (i32, i32) {
    %c0_i32 = arith.constant 0 : i32
    %c0_i32_0 = arith.constant 0 : i32
    %c0_i32_1 = arith.constant 0 : i32
    return %c0_i32, %c0_i32_0 : i32, i32
  }
  func.func @transform_5(%arg0: i32) -> (i32, i32) {
    %c0_i32 = arith.constant 0 : i32
    %c0_i32_0 = arith.constant 0 : i32
    %c0_i32_1 = arith.constant 0 : i32
    return %c0_i32, %c0_i32_0 : i32, i32
  }
  func.func @transform_6(%arg0: i32) -> (i32, i32) {
    %c0_i32 = arith.constant 0 : i32
    %c0_i32_0 = arith.constant 0 : i32
    %c0_i32_1 = arith.constant 0 : i32
    return %c0_i32, %c0_i32_0 : i32, i32
  }
  func.func @transform_7(%arg0: i32) -> (i32, i32) {
    %c0_i32 = arith.constant 0 : i32
    %c0_i32_0 = arith.constant 0 : i32
    %c0_i32_1 = arith.constant 0 : i32
    return %c0_i32, %c0_i32_0 : i32, i32
  }
  func.func @transform_8(%arg0: i32) -> (i32, i32, i32) {
    %c0_i32 = arith.constant 0 : i32
    %c0_i32_0 = arith.constant 0 : i32
    %c0_i32_1 = arith.constant 0 : i32
    return %arg0, %c0_i32, %c0_i32_0 : i32, i32, i32
  }
}

</mosaic_0001>

<llo_original>
// kernel: tpu_custom_call.1
$region0: #{tpu_custom_call.1}
  #allocation0 [shape = 'u32[]', space=smem, size = 0x4, offset = 0x4, fixed_abs, tag = 'smem constant byte address 0x4 - core index']
  #allocation1 [shape = 'u32[144,128]{1,0:T(1,128)}', space=vmem, size = 0x12000, scoped, tag = 'internal scratch']
  %s0 = inlined_call_operand.hbm [shape: f32[16,16], index: 0, kind: input, shape index: {}]
  %s1 = inlined_call_operand.vmem [shape: f32[2,16,8], index: 1, kind: input, shape index: {}]
  %s2 = inlined_call_operand.hbm [shape: f32[8,32], index: 2, kind: input, shape index: {}]
  %s3 = inlined_call_operand.hbm [shape: f32[8,32], index: 3, kind: input, shape index: {}]
  %s4 = inlined_call_operand.vmem [shape: f32[1,32], index: 4, kind: input, shape index: {}]
  %s5 = inlined_call_operand.vmem [shape: f32[32,128], index: 5, kind: input, shape index: {}]
  %s6 = inlined_call_operand.vmem [shape: f32[32,128], index: 6, kind: input, shape index: {}]
  %s7 = inlined_call_operand.vmem [shape: f32[1,128], index: 7, kind: input, shape index: {}]
  %s8 = inlined_call_operand.hbm [shape: f32[2,16,128], index: 8, kind: output, shape index: {}]
  %s9 = sld [smem:[#allocation0]]
  $region77: #{tpu_custom_call.1} parent=0
    _
  %s11 = ssub.s32 1, %s9
  %s12 = scalar_select 0, %s11, %s9
  $region1: #{tpu_custom_call.1} parent=0
    #allocation2 [shape = 'u8[8192]{0}', space=vmem, size = 0x2000, scoped, tag = 'input window, operand 0, single buffered']
    #allocation3 [shape = 's32[2]{0}', space=sflag, size = 0x8, scoped, tag = 'scoped memory for tpu_custom_call.1']
    #allocation4 [shape = 's32[2]{0}', space=sflag, size = 0x8, scoped, tag = 'scoped memory for tpu_custom_call.1']
    #allocation5 [shape = 'u8[4096]{0}', space=vmem, size = 0x1000, scoped, tag = 'input window, operand 2, single buffered']
    #allocation6 [shape = 's32[1]{0}', space=sflag, size = 0x4, scoped, tag = 'scoped memory for tpu_custom_call.1']
    #allocation7 [shape = 'u8[4096]{0}', space=vmem, size = 0x1000, scoped, tag = 'input window, operand 3, single buffered']
    #allocation8 [shape = 'u8[16384]{0}', space=vmem, size = 0x4000, scoped, tag = 'output window, operand 0']
    %13 = vsyncpa [#allocation3], 0
    %14 = vsyncpa [#allocation6], 0
    %15 = vsyncpa [#allocation4], 0
    %s16 = scalar_lea.sflag [#allocation4], 1
    %17 = vsyncpa %s16, 0
    loop: start=0, step=1, limit=4
    $region2: #{tpu_custom_call.1} parent=1 // loop_pre_header
      _
    $region3: #{tpu_custom_call.1} parent=1 // loop_header
      %s19 = sphi 0, %s23
      %p20 = scmp.ge.s32.totalorder %s19, 4
      %s27 = sphi 0, %s27
      %s29 = sphi 0, %s27
      %s30 = sphi 0, %s29
      %s44 = sphi 0, %s30
      %s50 = sphi 0, %s52
      %s53 = sphi 0, %s50
      %s54 = sphi 0, %s53
      %s70 = sphi 0, %s54
      %s74 = sphi 0, %s74
      %s76 = sphi 0, %s74
      %s77 = sphi 0, %s76
      %s91 = sphi 0, %s77
      %s95 = sphi 0, %s95
      %s97 = sphi 0, %s95
      %s98 = sphi 0, %s97
      %s112 = sphi 0, %s98
      %s116 = sphi 0, %s116
      %s118 = sphi 0, %s116
      %s119 = sphi 0, %s118
      %s133 = sphi 0, %s119
      %s137 = sphi 0, %s137
      %s139 = sphi 0, %s137
      %s140 = sphi 0, %s139
      %s154 = sphi 0, %s140
      %s158 = sphi 0, %s158
      %s160 = sphi 0, %s158
      %s161 = sphi 0, %s160
      %s175 = sphi 0, %s161
      %s179 = sphi 0, %s179
      %s181 = sphi 0, %s179
      %s182 = sphi 0, %s181
      %s196 = sphi 0, %s182
      %s202 = sphi 0, %s204
      %s205 = sphi 0, %s202
      %s206 = sphi 0, %s205
      %s222 = sphi 0, %s206
    $region4: #{tpu_custom_call.1} parent=1 // loop_header_branch
      %22 = sbr.rel (%p20) target = $region8
    $region5: #{tpu_custom_call.1} parent=1 // loop_body
      %s24 = ssub.s32 %s19, 1
      %s25 = ssub.s32 %s19, 2
      %s26 = sadd.s32 %s19, 1
      %s28 = sadd.s32 %s27, 1
      %p31 = scmp.eq.s32.totalorder %s19, 1
      %p32 = scmp.ne.s32.totalorder %s27, %s29
      %p33 = scmp.eq.s32.totalorder %s19, 0
      %p34 = por %p32, %p33
      %p35 = scmp.ne.s32.totalorder %s27, %s29
      %p36 = scmp.eq.s32.totalorder %s24, 1
      %p37 = por %p35, %p36
      %p38 = scmp.ne.s32.totalorder %s29, %s30
      %p39 = scmp.eq.s32.totalorder %s24, 0
      %p40 = por %p38, %p39
      %p41 = scmp.ne.s32.totalorder %s29, %s30
      %p42 = scmp.eq.s32.totalorder %s25, 1
      %p43 = por %p41, %p42
      %p45 = scmp.ne.s32.totalorder %s30, %s44
      %p46 = scmp.eq.s32.totalorder %s25, 0
      %p47 = por %p45, %p46
      %s48 = ssub.s32 %s19, %s26
      %p49 = scmp.eq.s32.totalorder %s48, 0
      %s51 = sadd.s32 %s50, 1
      %s52 = scalar_select %p49, %s50, %s51
      %p55 = pneg %p49
      %p56 = scmp.eq.s32.totalorder %s19, 1
      %p57 = por %p55, %p56
      %p58 = scmp.ne.s32.totalorder %s50, %s53
      %p59 = scmp.eq.s32.totalorder %s19, 0
      %p60 = por %p58, %p59
      %p61 = scmp.ne.s32.totalorder %s50, %s53
      %p62 = scmp.eq.s32.totalorder %s24, 1
      %p63 = por %p61, %p62
      %p64 = scmp.ne.s32.totalorder %s53, %s54
      %p65 = scmp.eq.s32.totalorder %s24, 0
      %p66 = por %p64, %p65
      %p67 = scmp.ne.s32.totalorder %s53, %s54
      %p68 = scmp.eq.s32.totalorder %s25, 1
      %p69 = por %p67, %p68
      %p71 = scmp.ne.s32.totalorder %s54, %s70
      %p72 = scmp.eq.s32.totalorder %s25, 0
      %p73 = por %p71, %p72
      %s75 = sadd.s32 %s74, 1
      %p78 = scmp.eq.s32.totalorder %s19, 1
      %p79 = scmp.ne.s32.totalorder %s74, %s76
      %p80 = scmp.eq.s32.totalorder %s19, 0
      %p81 = por %p79, %p80
      %p82 = scmp.ne.s32.totalorder %s74, %s76
      %p83 = scmp.eq.s32.totalorder %s24, 1
      %p84 = por %p82, %p83
      %p85 = scmp.ne.s32.totalorder %s76, %s77
      %p86 = scmp.eq.s32.totalorder %s24, 0
      %p87 = por %p85, %p86
      %p88 = scmp.ne.s32.totalorder %s76, %s77
      %p89 = scmp.eq.s32.totalorder %s25, 1
      %p90 = por %p88, %p89
      %p92 = scmp.ne.s32.totalorder %s77, %s91
      %p93 = scmp.eq.s32.totalorder %s25, 0
      %p94 = por %p92, %p93
      %s96 = sadd.s32 %s95, 1
      %p99 = scmp.eq.s32.totalorder %s19, 1
      %p100 = scmp.ne.s32.totalorder %s95, %s97
      %p101 = scmp.eq.s32.totalorder %s19, 0
      %p102 = por %p100, %p101
      %p103 = scmp.ne.s32.totalorder %s95, %s97
      %p104 = scmp.eq.s32.totalorder %s24, 1
      %p105 = por %p103, %p104
      %p106 = scmp.ne.s32.totalorder %s97, %s98
      %p107 = scmp.eq.s32.totalorder %s24, 0
      %p108 = por %p106, %p107
      %p109 = scmp.ne.s32.totalorder %s97, %s98
      %p110 = scmp.eq.s32.totalorder %s25, 1
      %p111 = por %p109, %p110
      %p113 = scmp.ne.s32.totalorder %s98, %s112
      %p114 = scmp.eq.s32.totalorder %s25, 0
      %p115 = por %p113, %p114
      %s117 = sadd.s32 %s116, 1
      %p120 = scmp.eq.s32.totalorder %s19, 1
      %p121 = scmp.ne.s32.totalorder %s116, %s118
      %p122 = scmp.eq.s32.totalorder %s19, 0
      %p123 = por %p121, %p122
      %p124 = scmp.ne.s32.totalorder %s116, %s118
      %p125 = scmp.eq.s32.totalorder %s24, 1
      %p126 = por %p124, %p125
      %p127 = scmp.ne.s32.totalorder %s118, %s119
      %p128 = scmp.eq.s32.totalorder %s24, 0
      %p129 = por %p127, %p128
      %p130 = scmp.ne.s32.totalorder %s118, %s119
      %p131 = scmp.eq.s32.totalorder %s25, 1
      %p132 = por %p130, %p131
      %p134 = scmp.ne.s32.totalorder %s119, %s133
      %p135 = scmp.eq.s32.totalorder %s25, 0
      %p136 = por %p134, %p135
      %s138 = sadd.s32 %s137, 1
      %p141 = scmp.eq.s32.totalorder %s19, 1
      %p142 = scmp.ne.s32.totalorder %s137, %s139
      %p143 = scmp.eq.s32.totalorder %s19, 0
      %p144 = por %p142, %p143
      %p145 = scmp.ne.s32.totalorder %s137, %s139
      %p146 = scmp.eq.s32.totalorder %s24, 1
      %p147 = por %p145, %p146
      %p148 = scmp.ne.s32.totalorder %s139, %s140
      %p149 = scmp.eq.s32.totalorder %s24, 0
      %p150 = por %p148, %p149
      %p151 = scmp.ne.s32.totalorder %s139, %s140
      %p152 = scmp.eq.s32.totalorder %s25, 1
      %p153 = por %p151, %p152
      %p155 = scmp.ne.s32.totalorder %s140, %s154
      %p156 = scmp.eq.s32.totalorder %s25, 0
      %p157 = por %p155, %p156
      %s159 = sadd.s32 %s158, 1
      %p162 = scmp.eq.s32.totalorder %s19, 1
      %p163 = scmp.ne.s32.totalorder %s158, %s160
      %p164 = scmp.eq.s32.totalorder %s19, 0
      %p165 = por %p163, %p164
      %p166 = scmp.ne.s32.totalorder %s158, %s160
      %p167 = scmp.eq.s32.totalorder %s24, 1
      %p168 = por %p166, %p167
      %p169 = scmp.ne.s32.totalorder %s160, %s161
      %p170 = scmp.eq.s32.totalorder %s24, 0
      %p171 = por %p169, %p170
      %p172 = scmp.ne.s32.totalorder %s160, %s161
      %p173 = scmp.eq.s32.totalorder %s25, 1
      %p174 = por %p172, %p173
      %p176 = scmp.ne.s32.totalorder %s161, %s175
      %p177 = scmp.eq.s32.totalorder %s25, 0
      %p178 = por %p176, %p177
      %s180 = sadd.s32 %s179, 1
      %p183 = scmp.eq.s32.totalorder %s19, 1
      %p184 = scmp.ne.s32.totalorder %s179, %s181
      %p185 = scmp.eq.s32.totalorder %s19, 0
      %p186 = por %p184, %p185
      %p187 = scmp.ne.s32.totalorder %s179, %s181
      %p188 = scmp.eq.s32.totalorder %s24, 1
      %p189 = por %p187, %p188
      %p190 = scmp.ne.s32.totalorder %s181, %s182
      %p191 = scmp.eq.s32.totalorder %s24, 0
      %p192 = por %p190, %p191
      %p193 = scmp.ne.s32.totalorder %s181, %s182
      %p194 = scmp.eq.s32.totalorder %s25, 1
      %p195 = por %p193, %p194
      %p197 = scmp.ne.s32.totalorder %s182, %s196
      %p198 = scmp.eq.s32.totalorder %s25, 0
      %p199 = por %p197, %p198
      %s200 = ssub.s32 %s19, %s26
      %p201 = scmp.eq.s32.totalorder %s200, 0
      %s203 = sadd.s32 %s202, 1
      %s204 = scalar_select %p201, %s202, %s203
      %p207 = pneg %p201
      %p208 = scmp.eq.s32.totalorder %s19, 1
      %p209 = por %p207, %p208
      %p210 = scmp.ne.s32.totalorder %s202, %s205
      %p211 = scmp.eq.s32.totalorder %s19, 0
      %p212 = por %p210, %p211
      %p213 = scmp.ne.s32.totalorder %s202, %s205
      %p214 = scmp.eq.s32.totalorder %s24, 1
      %p215 = por %p213, %p214
      %p216 = scmp.ne.s32.totalorder %s205, %s206
      %p217 = scmp.eq.s32.totalorder %s24, 0
      %p218 = por %p216, %p217
      %p219 = scmp.ne.s32.totalorder %s205, %s206
      %p220 = scmp.eq.s32.totalorder %s25, 1
      %p221 = por %p219, %p220
      %p223 = scmp.ne.s32.totalorder %s206, %s222
      %p224 = scmp.eq.s32.totalorder %s25, 0
      %p225 = por %p223, %p224
      %p226 = scmp.le.s32.totalorder 1, %s19
      %p227 = scmp.lt.s32.totalorder %s19, 3
      %p228 = pnand %p226, %p227
      %p229 = pneg %p228
      // Predicated region
      $region9: #{tpu_custom_call.1} parent=5 // pred_check
        _
      $region10: #{tpu_custom_call.1} parent=5 // pred_check_branch
        %231 = sbr.rel (%p228) target = $region12
      $region11: #{tpu_custom_call.1} parent=5 // pred_region
        %s232 = ssub.s32 %s19, 1
        // Predicated region
        $region13: #{tpu_custom_call.1} parent=11 // pred_check
          %p233 = pneg %p40
        $region14: #{tpu_custom_call.1} parent=11 // pred_check_branch
          %235 = sbr.rel (%p233) target = $region16
        $region15: #{tpu_custom_call.1} parent=11 // pred_region
          %s237 = ssub.s32 256, 256
          %238 = vsyncadd [#allocation3], %s237
          %s239 = sshll.u32 [#allocation2], 4
          %s240 = int_to_ptr.vmem [resolvable:$true] %s239
          %245 = dma.hbm_to_vmem [thread:$0]  %s0, 256, %s240, [#allocation3], 128, 128, 8
        $region16: #{tpu_custom_call.1} parent=11 // pred_fallthru
          _
        // Predicated region
        $region17: #{tpu_custom_call.1} parent=11 // pred_check
          %p246 = pneg %p87
        $region18: #{tpu_custom_call.1} parent=11 // pred_check_branch
          %248 = sbr.rel (%p246) target = $region20
        $region19: #{tpu_custom_call.1} parent=11 // pred_region
          %s250 = ssub.s32 128, 128
          %251 = vsyncadd [#allocation6], %s250
          %s253 = sshll.u32 [#allocation5], 4
          %s254 = int_to_ptr.vmem [resolvable:$true] %s253
          %256 = dma.hbm_to_vmem [thread:$0]  %s2, 128, %s254, [#allocation6]
        $region20: #{tpu_custom_call.1} parent=11 // pred_fallthru
          _
        // Predicated region
        $region21: #{tpu_custom_call.1} parent=11 // pred_check
          %p257 = pneg %p108
        $region22: #{tpu_custom_call.1} parent=11 // pred_check_branch
          %259 = sbr.rel (%p257) target = $region24
        $region23: #{tpu_custom_call.1} parent=11 // pred_region
          %s261 = ssub.s32 128, 128
          %262 = vsyncadd [#allocation6], %s261
          %s264 = sshll.u32 [#allocation7], 4
          %s265 = int_to_ptr.vmem [resolvable:$true] %s264
          %267 = dma.hbm_to_vmem [thread:$0]  %s3, 128, %s265, [#allocation6]
        $region24: #{tpu_custom_call.1} parent=11 // pred_fallthru
          _
        // Predicated region
        $region25: #{tpu_custom_call.1} parent=11 // pred_check
          %p268 = pneg %p129
        $region26: #{tpu_custom_call.1} parent=11 // pred_check_branch
          %270 = sbr.rel (%p268) target = $region28
        $region27: #{tpu_custom_call.1} parent=11 // pred_region
          _
        $region28: #{tpu_custom_call.1} parent=11 // pred_fallthru
          _
        // Predicated region
        $region29: #{tpu_custom_call.1} parent=11 // pred_check
          %p271 = pneg %p150
        $region30: #{tpu_custom_call.1} parent=11 // pred_check_branch
          %273 = sbr.rel (%p271) target = $region32
        $region31: #{tpu_custom_call.1} parent=11 // pred_region
          _
        $region32: #{tpu_custom_call.1} parent=11 // pred_fallthru
          _
        // Predicated region
        $region33: #{tpu_custom_call.1} parent=11 // pred_check
          %p274 = pneg %p171
        $region34: #{tpu_custom_call.1} parent=11 // pred_check_branch
          %276 = sbr.rel (%p274) target = $region36
        $region35: #{tpu_custom_call.1} parent=11 // pred_region
          _
        $region36: #{tpu_custom_call.1} parent=11 // pred_fallthru
          _
        // Predicated region
        $region37: #{tpu_custom_call.1} parent=11 // pred_check
          %p277 = pneg %p192
        $region38: #{tpu_custom_call.1} parent=11 // pred_check_branch
          %279 = sbr.rel (%p277) target = $region40
        $region39: #{tpu_custom_call.1} parent=11 // pred_region
          _
        $region40: #{tpu_custom_call.1} parent=11 // pred_fallthru
          _
      $region12: #{tpu_custom_call.1} parent=5 // pred_fallthru
        _
      %p280 = scmp.lt.s32.totalorder %s19, 2
      // Predicated region
      $region41: #{tpu_custom_call.1} parent=5 // pred_check
        %p281 = pneg %p280
      $region42: #{tpu_custom_call.1} parent=5 // pred_check_branch
        %283 = sbr.rel (%p281) target = $region44
      $region43: #{tpu_custom_call.1} parent=5 // pred_region
        // Predicated region
        $region45: #{tpu_custom_call.1} parent=43 // pred_check
          %p284 = pneg %p60
        $region46: #{tpu_custom_call.1} parent=43 // pred_check_branch
          %286 = sbr.rel (%p284) target = $region48
        $region47: #{tpu_custom_call.1} parent=43 // pred_region
          %p287 = scmp.lt.s32.totalorder %s19, 1
          %s288 = scalar_select %p287, %s19, 1
          %s289 = smul.addr %s288, 2
          %s290 = smul.addr %s289, 8
          %s291 = scalar_lea.vmem %s1, %s290
        $region48: #{tpu_custom_call.1} parent=43 // pred_fallthru
          _
      $region44: #{tpu_custom_call.1} parent=5 // pred_fallthru
        _
      %p292 = scmp.le.s32.totalorder 1, %s19
      %p293 = scmp.lt.s32.totalorder %s19, 3
      %p294 = pnand %p292, %p293
      %p295 = pneg %p294
      // Predicated region
      $region49: #{tpu_custom_call.1} parent=5 // pred_check
        _
      $region50: #{tpu_custom_call.1} parent=5 // pred_check_branch
        %297 = sbr.rel (%p294) target = $region52
      $region51: #{tpu_custom_call.1} parent=5 // pred_region
        %s298 = ssub.s32 %s19, 1
        // Predicated region
        $region53: #{tpu_custom_call.1} parent=51 // pred_check
          %p299 = pneg %p40
        $region54: #{tpu_custom_call.1} parent=51 // pred_check_branch
          %301 = sbr.rel (%p299) target = $region56
        $region55: #{tpu_custom_call.1} parent=51 // pred_region
          %302 = dma.done [#allocation3], 256
        $region56: #{tpu_custom_call.1} parent=51 // pred_fallthru
          _
        // Predicated region
        $region57: #{tpu_custom_call.1} parent=51 // pred_check
          %p303 = pneg %p87
        $region58: #{tpu_custom_call.1} parent=51 // pred_check_branch
          %305 = sbr.rel (%p303) target = $region60
        $region59: #{tpu_custom_call.1} parent=51 // pred_region
          %306 = dma.done [#allocation6], 128
        $region60: #{tpu_custom_call.1} parent=51 // pred_fallthru
          _
        // Predicated region
        $region61: #{tpu_custom_call.1} parent=51 // pred_check
          %p307 = pneg %p108
        $region62: #{tpu_custom_call.1} parent=51 // pred_check_branch
          %309 = sbr.rel (%p307) target = $region64
        $region63: #{tpu_custom_call.1} parent=51 // pred_region
          %310 = dma.done [#allocation6], 128
        $region64: #{tpu_custom_call.1} parent=51 // pred_fallthru
          _
        %p311 = pneg %p40
        %p312 = pneg %p37
        %p313 = scmp.lt.s32.totalorder %s24, 1
        %s314 = scalar_select %p313, %s24, 1
        %s315 = smul.addr %s314, 2
        %s316 = smul.addr %s315, 8
        %s317 = scalar_lea.vmem %s1, %s316
        %p318 = pneg %p66
        %p319 = pneg %p63
        %p320 = pneg %p87
        %p321 = pneg %p84
        %p322 = pneg %p108
        %p323 = pneg %p105
        %p324 = pneg %p129
        %p325 = pneg %p126
        %p326 = pneg %p150
        %p327 = pneg %p147
        %p328 = pneg %p171
        %p329 = pneg %p168
        %p330 = pneg %p192
        %p331 = pneg %p189
        %p332 = pneg %p218
        %p333 = pneg %p215
        %s334 = sand.u32 %s205, 1
        %s335 = scalar_lea.sflag [#allocation4], %s334
        %s336 = sand.u32 %s205, 1
        %s337 = smul.addr %s336, 16
        %s338 = scalar_lea.vmem [#allocation8], %s337
        %p339 = scmp.lt.s32.totalorder %s24, 1
        %s340 = scalar_select %p339, %s24, 1
        %s341 = smul.addr %s340, 2
        %s342 = smul.addr %s341, 8
        %s343 = scalar_lea.vmem %s1, %s342
        %v344 = vld [vmem:[#allocation2] sm:$0xff]
        %v345 = vld [vmem:[#allocation2 + $0x8] sm:$0xff]
        %v346 = vld [vmem:[%s343] sm:$0xff]
        %v347 = vld [vmem:[%s343 + $0x8] sm:$0xff]
        %vm348 = vcmask 130048
        %v350 = vsel %vm348, %v344, 0
        %v353 = vsel %vm348, %v345, 0
        %355 = vmatprep.subr.mxu0 0.0
        %356 = vmatpush1.msra.mxu0 %v346
        %357 = vmatprep.subr.mxu0 0.0
        %358 = vmatpush1.msra.mxu0 %v347
        %359 = vmatprep.subr.mxu0 0.0
        %360 = vmatpush1.msra.mxu0 0.0
        %361 = vmatprep.subr.mxu0 0.0
        %362 = vmatpush1.msra.mxu0 0.0
        %363 = vmatprep.subr.mxu0 0.0
        %364 = vmatpush1.msra.mxu0 0.0
        %365 = vmatprep.subr.mxu0 0.0
        %366 = vmatpush1.msra.mxu0 0.0
        %367 = vmatprep.subr.mxu0 0.0
        %368 = vmatpush1.msra.mxu0 0.0
        %369 = vmatprep.subr.mxu0 0.0
        %370 = vmatpush1.msra.mxu0 0.0
        %371 = vmatprep.subr.mxu0 0.0
        %372 = vmatpush1.msra.mxu0 0.0
        %373 = vmatprep.subr.mxu0 0.0
        %374 = vmatpush1.msra.mxu0 0.0
        %375 = vmatprep.subr.mxu0 0.0
        %376 = vmatpush1.msra.mxu0 0.0
        %377 = vmatprep.subr.mxu0 0.0
        %378 = vmatpush1.msra.mxu0 0.0
        %379 = vmatprep.subr.mxu0 0.0
        %380 = vmatpush1.msra.mxu0 0.0
        %381 = vmatprep.subr.mxu0 0.0
        %382 = vmatpush1.msra.mxu0 0.0
        %383 = vmatprep.subr.mxu0 0.0
        %384 = vmatpush1.msra.mxu0 0.0
        %385 = vmatprep.subr.mxu0 0.0
        %386 = vmatpush1.msra.mxu0 0.0
        %387 = vmatprep.subr.mxu0 0.0
        %388 = vmatpush1.msra.mxu0 0.0
        %389 = vmatprep.subr.mxu0 0.0
        %390 = vmatpush1.msra.mxu0 0.0
        %391 = vmatprep.subr.mxu0 0.0
        %392 = vmatpush1.msra.mxu0 0.0
        %393 = vmatprep.subr.mxu0 0.0
        %394 = vmatpush1.msra.mxu0 0.0
        %395 = vmatprep.subr.mxu0 0.0
        %396 = vmatpush1.msra.mxu0 0.0
        %397 = vmatprep.subr.mxu0 0.0
        %398 = vmatpush1.msra.mxu0 0.0
        %399 = vmatprep.subr.mxu0 0.0
        %400 = vmatpush1.msra.mxu0 0.0
        %401 = vmatprep.subr.mxu0 0.0
        %402 = vmatpush1.msra.mxu0 0.0
        %403 = vmatprep.subr.mxu0 0.0
        %404 = vmatpush1.msra.mxu0 0.0
        %405 = vmatprep.subr.mxu0 0.0
        %406 = vmatpush1.msra.mxu0 0.0
        %407 = vmatprep.subr.mxu0 0.0
        %408 = vmatpush1.msra.mxu0 0.0
        %409 = vmatprep.subr.mxu0 0.0
        %410 = vmatpush1.msra.mxu0 0.0
        %411 = vmatprep.subr.mxu0 0.0
        %412 = vmatpush1.msra.mxu0 0.0
        %413 = vmatprep.subr.mxu0 0.0
        %414 = vmatpush1.msra.mxu0 0.0
        %415 = vmatprep.subr.mxu0 0.0
        %416 = vmatpush1.msra.mxu0 0.0
        %417 = vmatprep.subr.mxu0 0.0
        %418 = vmatpush1.msra.mxu0 0.0
        %419 = vmatprep.mubr.f32.mxu0 0.0
        %420 = vmatmul.mubr.f32.gmra.mrb[0].mxu0 %v350
        %v421 = vpop.f32.mrb[0].mxu0
        %v422 = vadd.f32 0.0, %v421
        %v423 = vpop.f32.mrb[0].mxu0
        %424 = vmatprep.mubr.f32.mxu0 0.0
        %425 = vmatmul.mubr.f32.gmra.mrb[0].mxu0 %v353
        %v426 = vpop.f32.mrb[0].mxu0
        %v427 = vadd.f32 0.0, %v426
        %v428 = vpop.f32.mrb[0].mxu0
        %429 = vdwg.mxu0
        %v430 = vld [vmem:[#allocation5] sm:$0xff]
        %v431 = vld [vmem:[#allocation7] sm:$0xff]
        %vm432 = vcmask 64512
        %v434 = vsel %vm432, %v346, 0
        %v437 = vsel %vm432, %v347, 0
        %439 = vmatprep.subr.mxu0 0.0
        %440 = vmatpush1.msra.mxu0 %v431
        %441 = vmatprep.subr.mxu0 0.0
        %442 = vmatpush1.msra.mxu0 0.0
        %443 = vmatprep.subr.mxu0 0.0
        %444 = vmatpush1.msra.mxu0 0.0
        %445 = vmatprep.subr.mxu0 0.0
        %446 = vmatpush1.msra.mxu0 0.0
        %447 = vmatprep.subr.mxu0 0.0
        %448 = vmatpush1.msra.mxu0 0.0
        %449 = vmatprep.subr.mxu0 0.0
        %450 = vmatpush1.msra.mxu0 0.0
        %451 = vmatprep.subr.mxu0 0.0
        %452 = vmatpush1.msra.mxu0 0.0
        %453 = vmatprep.subr.mxu0 0.0
        %454 = vmatpush1.msra.mxu0 0.0
        %455 = vmatprep.subr.mxu0 0.0
        %456 = vmatpush1.msra.mxu0 0.0
        %457 = vmatprep.subr.mxu0 0.0
        %458 = vmatpush1.msra.mxu0 0.0
        %459 = vmatprep.subr.mxu0 0.0
        %460 = vmatpush1.msra.mxu0 0.0
        %461 = vmatprep.subr.mxu0 0.0
        %462 = vmatpush1.msra.mxu0 0.0
        %463 = vmatprep.subr.mxu0 0.0
        %464 = vmatpush1.msra.mxu0 0.0
        %465 = vmatprep.subr.mxu0 0.0
        %466 = vmatpush1.msra.mxu0 0.0
        %467 = vmatprep.subr.mxu0 0.0
        %468 = vmatpush1.msra.mxu0 0.0
        %469 = vmatprep.subr.mxu0 0.0
        %470 = vmatpush1.msra.mxu0 0.0
        %471 = vmatprep.subr.mxu0 0.0
        %472 = vmatpush1.msra.mxu0 0.0
        %473 = vmatprep.subr.mxu0 0.0
        %474 = vmatpush1.msra.mxu0 0.0
        %475 = vmatprep.subr.mxu0 0.0
        %476 = vmatpush1.msra.mxu0 0.0
        %477 = vmatprep.subr.mxu0 0.0
        %478 = vmatpush1.msra.mxu0 0.0
        %479 = vmatprep.subr.mxu0 0.0
        %480 = vmatpush1.msra.mxu0 0.0
        %481 = vmatprep.subr.mxu0 0.0
        %482 = vmatpush1.msra.mxu0 0.0
        %483 = vmatprep.subr.mxu0 0.0
        %484 = vmatpush1.msra.mxu0 0.0
        %485 = vmatprep.subr.mxu0 0.0
        %486 = vmatpush1.msra.mxu0 0.0
        %487 = vmatprep.subr.mxu0 0.0
        %488 = vmatpush1.msra.mxu0 0.0
        %489 = vmatprep.subr.mxu0 0.0
        %490 = vmatpush1.msra.mxu0 0.0
        %491 = vmatprep.subr.mxu0 0.0
        %492 = vmatpush1.msra.mxu0 0.0
        %493 = vmatprep.subr.mxu0 0.0
        %494 = vmatpush1.msra.mxu0 0.0
        %495 = vmatprep.subr.mxu0 0.0
        %496 = vmatpush1.msra.mxu0 0.0
        %497 = vmatprep.subr.mxu0 0.0
        %498 = vmatpush1.msra.mxu0 0.0
        %499 = vmatprep.subr.mxu0 0.0
        %500 = vmatpush1.msra.mxu0 0.0
        %501 = vmatprep.subr.mxu0 0.0
        %502 = vmatpush1.msra.mxu0 0.0
        %503 = vmatprep.mubr.f32.mxu0 0.0
        %504 = vmatmul.mubr.f32.gmra.mrb[0].mxu0 %v434
        %v505 = vpop.f32.mrb[0].mxu0
        %v506 = vadd.f32 0.0, %v505
        %v507 = vpop.f32.mrb[0].mxu0
        %508 = vmatprep.mubr.f32.mxu0 0.0
        %509 = vmatmul.mubr.f32.gmra.mrb[0].mxu0 %v437
        %v510 = vpop.f32.mrb[0].mxu0
        %v511 = vadd.f32 0.0, %v510
        %v512 = vpop.f32.mrb[0].mxu0
        %513 = vdwg.mxu0
        %v515 = vsel %vm432, %v422, 0
        %v518 = vsel %vm432, %v427, 0
        %520 = vmatprep.subr.mxu0 0.0
        %521 = vmatpush1.msra.mxu0 %v430
        %522 = vmatprep.subr.mxu0 0.0
        %523 = vmatpush1.msra.mxu0 0.0
        %524 = vmatprep.subr.mxu0 0.0
        %525 = vmatpush1.msra.mxu0 0.0
        %526 = vmatprep.subr.mxu0 0.0
        %527 = vmatpush1.msra.mxu0 0.0
        %528 = vmatprep.subr.mxu0 0.0
        %529 = vmatpush1.msra.mxu0 0.0
        %530 = vmatprep.subr.mxu0 0.0
        %531 = vmatpush1.msra.mxu0 0.0
        %532 = vmatprep.subr.mxu0 0.0
        %533 = vmatpush1.msra.mxu0 0.0
        %534 = vmatprep.subr.mxu0 0.0
        %535 = vmatpush1.msra.mxu0 0.0
        %536 = vmatprep.subr.mxu0 0.0
        %537 = vmatpush1.msra.mxu0 0.0
        %538 = vmatprep.subr.mxu0 0.0
        %539 = vmatpush1.msra.mxu0 0.0
        %540 = vmatprep.subr.mxu0 0.0
        %541 = vmatpush1.msra.mxu0 0.0
        %542 = vmatprep.subr.mxu0 0.0
        %543 = vmatpush1.msra.mxu0 0.0
        %544 = vmatprep.subr.mxu0 0.0
        %545 = vmatpush1.msra.mxu0 0.0
        %546 = vmatprep.subr.mxu0 0.0
        %547 = vmatpush1.msra.mxu0 0.0
        %548 = vmatprep.subr.mxu0 0.0
        %549 = vmatpush1.msra.mxu0 0.0
        %550 = vmatprep.subr.mxu0 0.0
        %551 = vmatpush1.msra.mxu0 0.0
        %552 = vmatprep.subr.mxu0 0.0
        %553 = vmatpush1.msra.mxu0 0.0
        %554 = vmatprep.subr.mxu0 0.0
        %555 = vmatpush1.msra.mxu0 0.0
        %556 = vmatprep.subr.mxu0 0.0
        %557 = vmatpush1.msra.mxu0 0.0
        %558 = vmatprep.subr.mxu0 0.0
        %559 = vmatpush1.msra.mxu0 0.0
        %560 = vmatprep.subr.mxu0 0.0
        %561 = vmatpush1.msra.mxu0 0.0
        %562 = vmatprep.subr.mxu0 0.0
        %563 = vmatpush1.msra.mxu0 0.0
        %564 = vmatprep.subr.mxu0 0.0
        %565 = vmatpush1.msra.mxu0 0.0
        %566 = vmatprep.subr.mxu0 0.0
        %567 = vmatpush1.msra.mxu0 0.0
        %568 = vmatprep.subr.mxu0 0.0
        %569 = vmatpush1.msra.mxu0 0.0
        %570 = vmatprep.subr.mxu0 0.0
        %571 = vmatpush1.msra.mxu0 0.0
        %572 = vmatprep.subr.mxu0 0.0
        %573 = vmatpush1.msra.mxu0 0.0
        %574 = vmatprep.subr.mxu0 0.0
        %575 = vmatpush1.msra.mxu0 0.0
        %576 = vmatprep.subr.mxu0 0.0
        %577 = vmatpush1.msra.mxu0 0.0
        %578 = vmatprep.subr.mxu0 0.0
        %579 = vmatpush1.msra.mxu0 0.0
        %580 = vmatprep.subr.mxu0 0.0
        %581 = vmatpush1.msra.mxu0 0.0
        %582 = vmatprep.subr.mxu0 0.0
        %583 = vmatpush1.msra.mxu0 0.0
        %584 = vmatprep.mubr.f32.mxu0 0.0
        %585 = vmatmul.mubr.f32.gmra.mrb[0].mxu0 %v515
        %v586 = vpop.f32.mrb[0].mxu0
        %v587 = vadd.f32 %v506, %v586
        %v588 = vpop.f32.mrb[0].mxu0
        %589 = vmatprep.mubr.f32.mxu0 0.0
        %590 = vmatmul.mubr.f32.gmra.mrb[0].mxu0 %v518
        %v591 = vpop.f32.mrb[0].mxu0
        %v592 = vadd.f32 %v511, %v591
        %v593 = vpop.f32.mrb[0].mxu0
        %594 = vdwg.mxu0
        %v595 = vld [vmem:[%s4] sm:$0x1]
        %v597 = vlaneseq
        %v598 = vshrl.u32 %v597, 7
        %v599 = vsub.s32 0, %v598
        %v600 = vrot.slane %v595, %v599
        %v602 = vadd.f32 %v587, %v600
        %v603 = vadd.f32 %v592, %v600
        %v604 = vmax.f32 %v602, 0.0
        %v605 = vmax.f32 %v603, 0.0
        %606 = vmatprep.subr.mxu0 0.0
        %607 = vmatpush1.msra.mxu0 %v604
        %608 = vmatprep.subr.mxu0 0.0
        %609 = vmatpush1.msra.mxu0 %v605
        %610 = vmatprep.subr.mxu0 0.0
        %611 = vmatpush1.msra.mxu0 0.0
        %612 = vmatprep.subr.mxu0 0.0
        %613 = vmatpush1.msra.mxu0 0.0
        %614 = vmatprep.subr.mxu0 0.0
        %615 = vmatpush1.msra.mxu0 0.0
        %616 = vmatprep.subr.mxu0 0.0
        %617 = vmatpush1.msra.mxu0 0.0
        %618 = vmatprep.subr.mxu0 0.0
        %619 = vmatpush1.msra.mxu0 0.0
        %620 = vmatprep.subr.mxu0 0.0
        %621 = vmatpush1.msra.mxu0 0.0
        %622 = vmatprep.subr.mxu0 0.0
        %623 = vmatpush1.msra.mxu0 0.0
        %624 = vmatprep.subr.mxu0 0.0
        %625 = vmatpush1.msra.mxu0 0.0
        %626 = vmatprep.subr.mxu0 0.0
        %627 = vmatpush1.msra.mxu0 0.0
        %628 = vmatprep.subr.mxu0 0.0
        %629 = vmatpush1.msra.mxu0 0.0
        %630 = vmatprep.subr.mxu0 0.0
        %631 = vmatpush1.msra.mxu0 0.0
        %632 = vmatprep.subr.mxu0 0.0
        %633 = vmatpush1.msra.mxu0 0.0
        %634 = vmatprep.subr.mxu0 0.0
        %635 = vmatpush1.msra.mxu0 0.0
        %636 = vmatprep.subr.mxu0 0.0
        %637 = vmatpush1.msra.mxu0 0.0
        %638 = vmatprep.subr.mxu0 0.0
        %639 = vmatpush1.msra.mxu0 0.0
        %640 = vmatprep.subr.mxu0 0.0
        %641 = vmatpush1.msra.mxu0 0.0
        %642 = vmatprep.subr.mxu0 0.0
        %643 = vmatpush1.msra.mxu0 0.0
        %644 = vmatprep.subr.mxu0 0.0
        %645 = vmatpush1.msra.mxu0 0.0
        %646 = vmatprep.subr.mxu0 0.0
        %647 = vmatpush1.msra.mxu0 0.0
        %648 = vmatprep.subr.mxu0 0.0
        %649 = vmatpush1.msra.mxu0 0.0
        %650 = vmatprep.subr.mxu0 0.0
        %651 = vmatpush1.msra.mxu0 0.0
        %652 = vmatprep.subr.mxu0 0.0
        %653 = vmatpush1.msra.mxu0 0.0
        %654 = vmatprep.subr.mxu0 0.0
        %655 = vmatpush1.msra.mxu0 0.0
        %656 = vmatprep.subr.mxu0 0.0
        %657 = vmatpush1.msra.mxu0 0.0
        %658 = vmatprep.subr.mxu0 0.0
        %659 = vmatpush1.msra.mxu0 0.0
        %660 = vmatprep.subr.mxu0 0.0
        %661 = vmatpush1.msra.mxu0 0.0
        %662 = vmatprep.subr.mxu0 0.0
        %663 = vmatpush1.msra.mxu0 0.0
        %664 = vmatprep.subr.mxu0 0.0
        %665 = vmatpush1.msra.mxu0 0.0
        %666 = vmatprep.subr.mxu0 0.0
        %667 = vmatpush1.msra.mxu0 0.0
        %668 = vmatprep.subr.mxu0 0.0
        %669 = vmatpush1.msra.mxu0 0.0
        %670 = vmatprep.mubr.f32.mxu0 0.0
        %671 = vmatmul.mubr.f32.gmra.mrb[0].mxu0 %v350
        %v672 = vpop.f32.mrb[0].mxu0
        %v673 = vadd.f32 0.0, %v672
        %v674 = vpop.f32.mrb[0].mxu0
        %675 = vmatprep.mubr.f32.mxu0 0.0
        %676 = vmatmul.mubr.f32.gmra.mrb[0].mxu0 %v353
        %v677 = vpop.f32.mrb[0].mxu0
        %v678 = vadd.f32 0.0, %v677
        %v679 = vpop.f32.mrb[0].mxu0
        %680 = vdwg.mxu0
        %v681 = vld [vmem:[%s5] sm:$0xff]
        %v682 = vld [vmem:[%s5 + $0x8] sm:$0xff]
        %v683 = vld [vmem:[%s5 + $0x10] sm:$0xff]
        %v684 = vld [vmem:[%s5 + $0x18] sm:$0xff]
        %v685 = vld [vmem:[%s6] sm:$0xff]
        %v686 = vld [vmem:[%s6 + $0x8] sm:$0xff]
        %v687 = vld [vmem:[%s6 + $0x10] sm:$0xff]
        %v688 = vld [vmem:[%s6 + $0x18] sm:$0xff]
        %vm689 = vcmask 261120
        %v691 = vsel %vm689, %v604, 0
        %v694 = vsel %vm689, %v605, 0
        %696 = vmatprep.subr.mxu0 0.0
        %697 = vmatpush1.msra.mxu0 %v685
        %698 = vmatprep.subr.mxu0 0.0
        %699 = vmatpush1.msra.mxu0 %v686
        %700 = vmatprep.subr.mxu0 0.0
        %701 = vmatpush1.msra.mxu0 %v687
        %702 = vmatprep.subr.mxu0 0.0
        %703 = vmatpush1.msra.mxu0 %v688
        %704 = vmatprep.subr.mxu0 0.0
        %705 = vmatpush1.msra.mxu0 0.0
        %706 = vmatprep.subr.mxu0 0.0
        %707 = vmatpush1.msra.mxu0 0.0
        %708 = vmatprep.subr.mxu0 0.0
        %709 = vmatpush1.msra.mxu0 0.0
        %710 = vmatprep.subr.mxu0 0.0
        %711 = vmatpush1.msra.mxu0 0.0
        %712 = vmatprep.subr.mxu0 0.0
        %713 = vmatpush1.msra.mxu0 0.0
        %714 = vmatprep.subr.mxu0 0.0
        %715 = vmatpush1.msra.mxu0 0.0
        %716 = vmatprep.subr.mxu0 0.0
        %717 = vmatpush1.msra.mxu0 0.0
        %718 = vmatprep.subr.mxu0 0.0
        %719 = vmatpush1.msra.mxu0 0.0
        %720 = vmatprep.subr.mxu0 0.0
        %721 = vmatpush1.msra.mxu0 0.0
        %722 = vmatprep.subr.mxu0 0.0
        %723 = vmatpush1.msra.mxu0 0.0
        %724 = vmatprep.subr.mxu0 0.0
        %725 = vmatpush1.msra.mxu0 0.0
        %726 = vmatprep.subr.mxu0 0.0
        %727 = vmatpush1.msra.mxu0 0.0
        %728 = vmatprep.subr.mxu0 0.0
        %729 = vmatpush1.msra.mxu0 0.0
        %730 = vmatprep.subr.mxu0 0.0
        %731 = vmatpush1.msra.mxu0 0.0
        %732 = vmatprep.subr.mxu0 0.0
        %733 = vmatpush1.msra.mxu0 0.0
        %734 = vmatprep.subr.mxu0 0.0
        %735 = vmatpush1.msra.mxu0 0.0
        %736 = vmatprep.subr.mxu0 0.0
        %737 = vmatpush1.msra.mxu0 0.0
        %738 = vmatprep.subr.mxu0 0.0
        %739 = vmatpush1.msra.mxu0 0.0
        %740 = vmatprep.subr.mxu0 0.0
        %741 = vmatpush1.msra.mxu0 0.0
        %742 = vmatprep.subr.mxu0 0.0
        %743 = vmatpush1.msra.mxu0 0.0
        %744 = vmatprep.subr.mxu0 0.0
        %745 = vmatpush1.msra.mxu0 0.0
        %746 = vmatprep.subr.mxu0 0.0
        %747 = vmatpush1.msra.mxu0 0.0
        %748 = vmatprep.subr.mxu0 0.0
        %749 = vmatpush1.msra.mxu0 0.0
        %750 = vmatprep.subr.mxu0 0.0
        %751 = vmatpush1.msra.mxu0 0.0
        %752 = vmatprep.subr.mxu0 0.0
        %753 = vmatpush1.msra.mxu0 0.0
        %754 = vmatprep.subr.mxu0 0.0
        %755 = vmatpush1.msra.mxu0 0.0
        %756 = vmatprep.subr.mxu0 0.0
        %757 = vmatpush1.msra.mxu0 0.0
        %758 = vmatprep.subr.mxu0 0.0
        %759 = vmatpush1.msra.mxu0 0.0
        %760 = vmatprep.mubr.f32.mxu0 0.0
        %761 = vmatmul.mubr.f32.gmra.mrb[0].mxu0 %v691
        %v762 = vpop.f32.mrb[0].mxu0
        %v763 = vadd.f32 0.0, %v762
        %v764 = vpop.f32.mrb[0].mxu0
        %765 = vmatprep.mubr.f32.mxu0 0.0
        %766 = vmatmul.mubr.f32.gmra.mrb[0].mxu0 %v694
        %v767 = vpop.f32.mrb[0].mxu0
        %v768 = vadd.f32 0.0, %v767
        %v769 = vpop.f32.mrb[0].mxu0
        %770 = vdwg.mxu0
        %v772 = vsel %vm689, %v673, 0
        %v775 = vsel %vm689, %v678, 0
        %777 = vmatprep.subr.mxu0 0.0
        %778 = vmatpush1.msra.mxu0 %v681
        %779 = vmatprep.subr.mxu0 0.0
        %780 = vmatpush1.msra.mxu0 %v682
        %781 = vmatprep.subr.mxu0 0.0
        %782 = vmatpush1.msra.mxu0 %v683
        %783 = vmatprep.subr.mxu0 0.0
        %784 = vmatpush1.msra.mxu0 %v684
        %785 = vmatprep.subr.mxu0 0.0
        %786 = vmatpush1.msra.mxu0 0.0
        %787 = vmatprep.subr.mxu0 0.0
        %788 = vmatpush1.msra.mxu0 0.0
        %789 = vmatprep.subr.mxu0 0.0
        %790 = vmatpush1.msra.mxu0 0.0
        %791 = vmatprep.subr.mxu0 0.0
        %792 = vmatpush1.msra.mxu0 0.0
        %793 = vmatprep.subr.mxu0 0.0
        %794 = vmatpush1.msra.mxu0 0.0
        %795 = vmatprep.subr.mxu0 0.0
        %796 = vmatpush1.msra.mxu0 0.0
        %797 = vmatprep.subr.mxu0 0.0
        %798 = vmatpush1.msra.mxu0 0.0
        %799 = vmatprep.subr.mxu0 0.0
        %800 = vmatpush1.msra.mxu0 0.0
        %801 = vmatprep.subr.mxu0 0.0
        %802 = vmatpush1.msra.mxu0 0.0
        %803 = vmatprep.subr.mxu0 0.0
        %804 = vmatpush1.msra.mxu0 0.0
        %805 = vmatprep.subr.mxu0 0.0
        %806 = vmatpush1.msra.mxu0 0.0
        %807 = vmatprep.subr.mxu0 0.0
        %808 = vmatpush1.msra.mxu0 0.0
        %809 = vmatprep.subr.mxu0 0.0
        %810 = vmatpush1.msra.mxu0 0.0
        %811 = vmatprep.subr.mxu0 0.0
        %812 = vmatpush1.msra.mxu0 0.0
        %813 = vmatprep.subr.mxu0 0.0
        %814 = vmatpush1.msra.mxu0 0.0
        %815 = vmatprep.subr.mxu0 0.0
        %816 = vmatpush1.msra.mxu0 0.0
        %817 = vmatprep.subr.mxu0 0.0
        %818 = vmatpush1.msra.mxu0 0.0
        %819 = vmatprep.subr.mxu0 0.0
        %820 = vmatpush1.msra.mxu0 0.0
        %821 = vmatprep.subr.mxu0 0.0
        %822 = vmatpush1.msra.mxu0 0.0
        %823 = vmatprep.subr.mxu0 0.0
        %824 = vmatpush1.msra.mxu0 0.0
        %825 = vmatprep.subr.mxu0 0.0
        %826 = vmatpush1.msra.mxu0 0.0
        %827 = vmatprep.subr.mxu0 0.0
        %828 = vmatpush1.msra.mxu0 0.0
        %829 = vmatprep.subr.mxu0 0.0
        %830 = vmatpush1.msra.mxu0 0.0
        %831 = vmatprep.subr.mxu0 0.0
        %832 = vmatpush1.msra.mxu0 0.0
        %833 = vmatprep.subr.mxu0 0.0
        %834 = vmatpush1.msra.mxu0 0.0
        %835 = vmatprep.subr.mxu0 0.0
        %836 = vmatpush1.msra.mxu0 0.0
        %837 = vmatprep.subr.mxu0 0.0
        %838 = vmatpush1.msra.mxu0 0.0
        %839 = vmatprep.subr.mxu0 0.0
        %840 = vmatpush1.msra.mxu0 0.0
        %841 = vmatprep.mubr.f32.mxu0 0.0
        %842 = vmatmul.mubr.f32.gmra.mrb[0].mxu0 %v772
        %v843 = vpop.f32.mrb[0].mxu0
        %v844 = vadd.f32 %v763, %v843
        %v845 = vpop.f32.mrb[0].mxu0
        %846 = vmatprep.mubr.f32.mxu0 0.0
        %847 = vmatmul.mubr.f32.gmra.mrb[0].mxu0 %v775
        %v848 = vpop.f32.mrb[0].mxu0
        %v849 = vadd.f32 %v768, %v848
        %v850 = vpop.f32.mrb[0].mxu0
        %851 = vdwg.mxu0
        %v852 = vld [vmem:[%s7] sm:$0x1]
        %v854 = vlaneseq
        %v855 = vshrl.u32 %v854, 7
        %v856 = vsub.s32 0, %v855
        %v857 = vrot.slane %v852, %v856
        %v859 = vadd.f32 %v844, %v857
        %v860 = vadd.f32 %v849, %v857
        %v861 = vmax.f32 %v859, -10.0
        %v862 = vmax.f32 %v860, -10.0
        %v863 = vmin.f32 %v861, 10.0
        %v864 = vmin.f32 %v862, 10.0
        %865 = vst [vmem:[%s338] sm:$0xff] %v863
        %866 = vst [vmem:[%s338 + $0x8] sm:$0xff] %v864
        %s867 = sand.u32 %s205, 1
        %s868 = scalar_lea.sflag [#allocation4], %s867
        %s869 = sand.u32 %s205, 1
        %s870 = smul.addr %s869, 16
        %s871 = scalar_lea.vmem [#allocation8], %s870
        // Predicated region
        $region65: #{tpu_custom_call.1} parent=51 // pred_check
          %p872 = pneg %p215
        $region66: #{tpu_custom_call.1} parent=51 // pred_check_branch
          %874 = sbr.rel (%p872) target = $region68
        $region67: #{tpu_custom_call.1} parent=51 // pred_region
          %s876 = ssub.s32 256, 256
          %877 = vsyncadd %s868, %s876
          %s878 = smul.addr %s24, 2
          %s879 = smul.addr %s878, 128
          %s880 = scalar_lea.hbm %s8, %s879
          %s881 = sshll.u32 %s871, 4
          %s882 = int_to_ptr.vmem [resolvable:$true] %s881
          %887 = dma.vmem_to_hbm [thread:$0]  %s882, 256, %s880, %s868, 128, 128, 8
        $region68: #{tpu_custom_call.1} parent=51 // pred_fallthru
          _
      $region52: #{tpu_custom_call.1} parent=5 // pred_fallthru
        _
      %p888 = scmp.le.s32.totalorder 2, %s19
      // Predicated region
      $region69: #{tpu_custom_call.1} parent=5 // pred_check
        %p889 = pneg %p888
      $region70: #{tpu_custom_call.1} parent=5 // pred_check_branch
        %891 = sbr.rel (%p889) target = $region72
      $region71: #{tpu_custom_call.1} parent=5 // pred_region
        %s892 = ssub.s32 %s19, 2
        // Predicated region
        $region73: #{tpu_custom_call.1} parent=71 // pred_check
          %p893 = pneg %p221
        $region74: #{tpu_custom_call.1} parent=71 // pred_check_branch
          %895 = sbr.rel (%p893) target = $region76
        $region75: #{tpu_custom_call.1} parent=71 // pred_region
          %s896 = sand.u32 %s206, 1
          %s897 = scalar_lea.sflag [#allocation4], %s896
          %s898 = sand.u32 %s206, 1
          %s899 = smul.addr %s898, 16
          %s900 = scalar_lea.vmem [#allocation8], %s899
          %901 = dma.done %s897, 256
        $region76: #{tpu_custom_call.1} parent=71 // pred_fallthru
          _
      $region72: #{tpu_custom_call.1} parent=5 // pred_fallthru
        _
    $region6: #{tpu_custom_call.1} parent=1 // loop_footer
      %s23 = sadd.s32 1, %s19
    $region7: #{tpu_custom_call.1} parent=1 // loop_footer_branch
      %18 = sbr.rel target = $region3
    $region8: #{tpu_custom_call.1} parent=1 // loop_exit
      _
    %902 = vsyncpa [#allocation3], 1
    %s903 = scalar_lea.sflag [#allocation3], 1
    %904 = vsyncpa %s903, 1
    %905 = vsyncpa [#allocation6], 1
    %906 = vsyncpa [#allocation4], 1
    %s907 = scalar_lea.sflag [#allocation4], 1
    %908 = vsyncpa %s907, 1

</llo_original>
